<compile_context>
chip_gen: v6e
topology: v6e:2x2x1
jax: 0.10.0
libtpu: 0.0.40
codegen_flags: <defaults>
</compile_context>

<pallas_src>
import math
import numpy as np
from numpy import pi
from numpy.polynomial.polynomial import polyval

import jax
import jax.numpy as jnp
from jax.experimental import pallas as pl
from jax.experimental.pallas import tpu as pltpu


# ------------------------- Hermite basis construction (numpy, init-time) ----

_gamma_vec = np.vectorize(math.gamma)


def hermcgen(mu, nu):
    """Generate coefficients of 2D Hermite functions."""
    nur = np.arange(nu + 1)
    num = math.gamma(mu + nu + 1) * math.gamma(nu + 1) * (-2.0) ** (nu - nur)
    denom = _gamma_vec(mu + 1 + nur) * _gamma_vec(1 + nur) * _gamma_vec(nu + 1 - nur)
    return num / denom


def hermite_2d(N, npts, xvalmax=None):
    """Generate 2D Hermite function basis (N*(N+1)/2, npts, npts)."""
    xvalmax = xvalmax or 2.5 * np.sqrt(N)
    ranks = range(N)
    xvalmax *= 1 - 1 / npts
    xvals = np.linspace(-xvalmax, xvalmax, npts, endpoint=True)[..., None]
    gxv = np.exp(-xvals ** 2 / 4)
    gaussian = np.dot(gxv, gxv.T)
    mu = np.array([])
    nu = np.array([])
    desc = []
    for rank in ranks:
        muadd = np.sort(np.abs(np.arange(-rank, rank + 0.1, 2)))
        mu = np.hstack([mu, muadd])
        nu = np.hstack([nu, (rank - muadd) / 2])
        if not rank % 2:
            desc.append("z")
        desc += ["r", "i"] * int(np.floor((rank + 1) / 2))
    theta = np.arctan2(xvals, xvals.T)
    radsq = xvals ** 2 + xvals.T ** 2
    nbases = mu.size
    H = np.zeros([nbases, npts, npts])
    for i, (mui, nui, desci) in enumerate(zip(mu, nu, desc)):
        radvals = polyval(radsq, hermcgen(mui, nui))
        basis = gaussian * radsq ** (mui / 2) * radvals * np.exp(1j * mui * theta)
        basis /= np.sqrt(
            2 ** (mui + 2 * nui)
            * pi
            * math.factorial(int(round(mui + nui)))
            * math.factorial(int(round(nui)))
        )
        if desci == "z":
            H[i] = basis.real / np.sqrt(2)
        elif desci == "r":
            H[i] = basis.real
        elif desci == "i":
            H[i] = basis.imag
    return (H / np.sqrt(np.sum(H ** 2, axis=(1, 2), keepdims=True)), desc, mu)


def rotation_matrix(desc, mu, angle):
    R = np.zeros((len(desc), len(desc)))
    for i, (d, m) in enumerate(zip(desc, mu)):
        if d == "r":
            Rc = np.array(
                [
                    [np.cos(m * angle), np.sin(m * angle)],
                    [-np.sin(m * angle), np.cos(m * angle)],
                ]
            )
            R[i : i + 2, i : i + 2] = Rc
        elif d == "z":
            R[i, i] = 1
    return R


# ------------------------------------------------------------ Pallas kernel -

def _rotate_hermite_kernel(ht_ref, d_ref, o_ref):
    # ht_ref: (P, B)   flattened Hermite basis, transposed (constant across grid;
    #                  constant index_map -> Pallas does not re-DMA it per step)
    # d_ref : (B, tn)  rotated + channel-shifted coeff columns (final order)
    # o_ref : (P, tn)  lane-dense output tile (tn is a multiple of 128)
    o_ref[...] = jnp.dot(
        ht_ref[...], d_ref[...], preferred_element_type=jnp.float32
    ).astype(o_ref.dtype)


def _round_up(x, m):
    return -(-x // m) * m


def rotate_hermite_forward(coeffs, H, Rs, num_rotations, first_layer,
                           out_dtype=jnp.float32):
    """coeffs: [nbases, Nin_total, Nout]; H: [nbases, npts, npts];
    Rs: [num_rotations, nbases, nbases].
    Returns [npts, npts, Nin_total, Nout * num_rotations] (same as PyTorch)."""
    nbases, npts, _ = H.shape
    num_coeffs, nin_total, nout = coeffs.shape
    assert num_coeffs == nbases
    R = num_rotations
    P = npts * npts
    num_inputs = nin_total // R
    n_cols = nin_total * R * nout

    ht = jnp.asarray(H, jnp.float32).reshape(nbases, P).T      # (P, B)
    cf = jnp.asarray(coeffs, jnp.float32)                      # (B, Nin, Nout)
    rs = jnp.asarray(Rs, jnp.float32)                          # (R, B, B)

    # --- prologue on the tiny coeffs tensor: one gather + one einsum --------
    # Circular input-channel shift per rotation, expressed as a static gather
    # index (new[n] = cf[(n + shift_r) % Nin]) and folded into a single take.
    if first_layer:
        shifts = np.zeros(R, dtype=np.int64)
    else:
        shifts = np.array(
            [0] + [nin_total - i * num_inputs for i in range(1, R)], dtype=np.int64
        )
    idx = (np.arange(nin_total)[None, :] + shifts[:, None]) % nin_total  # (R, Nin)
    rolled = jnp.take(cf, jnp.asarray(idx), axis=1)            # (B, R, Nin, Nout)

    # Rotate coefficients and emit straight into the FINAL column order:
    #   D[a, n*(R*Nout) + r*Nout + o] = sum_b Rs[r,a,b] * cf[b,(n+shift_r)%Nin,o]
    d = jnp.einsum(
        "rab,brno->anro", rs, rolled, precision=jax.lax.Precision.HIGHEST
    ).reshape(nbases, n_cols)                                  # (B, n_cols)

    # --- column-tile size: VMEM-budgeted, lane-dense, no output padding -----
    LANE = 128
    # Budget the double-buffered (d-tile + out-tile) footprint conservatively
    # for v7x (64 MiB physical VMEM per TC, 32 MiB default scoped).
    VMEM_BUDGET = 24 * 1024 * 1024
    bytes_per_col = 2 * 4 * (P + nbases)          # 2x-buffered in + out columns
    tn_cap = max(LANE, ((VMEM_BUDGET - P * nbases * 4) // bytes_per_col)
                 // LANE * LANE)

    # Target >= 2 column tiles when there is enough work, so both v7x
    # TensorCores get a share (harmless ~0.35 us extra step on v5e/v6e).
    min_tiles = 2 if n_cols >= 2 * LANE else 1
    tn = min(_round_up(pl.cdiv(n_cols, min_tiles), LANE), tn_cap)
    tn = max(tn, LANE)
    # If n_cols is a multiple of 128, snap tn down (by at most 2x) to an exact
    # divisor so no tile needs masked stores at all.
    if n_cols % LANE == 0:
        units = n_cols // LANE
        u0 = tn // LANE
        for u in range(u0, max(u0 // 2, 0), -1):
            if units % u == 0:
                tn = u * LANE
                break
    grid_n = pl.cdiv(n_cols, tn)

    footprint = P * nbases * 4 + 2 * (nbases + P) * tn * 4
    vmem_limit = min(max(int(1.5 * footprint), 16 << 20), 48 << 20)

    out2d = pl.pallas_call(
        _rotate_hermite_kernel,
        out_shape=jax.ShapeDtypeStruct((P, n_cols), out_dtype),
        grid_spec=pltpu.PrefetchScalarGridSpec(
            num_scalar_prefetch=0,
            grid=(grid_n,),
            in_specs=[
                pl.BlockSpec((P, nbases), lambda j: (0, 0)),
                pl.BlockSpec((nbases, tn), lambda j: (0, j)),
            ],
            out_specs=pl.BlockSpec((P, tn), lambda j: (0, j)),
        ),
        compiler_params=pltpu.CompilerParams(
            dimension_semantics=("parallel",),
            vmem_limit_bytes=vmem_limit,
        ),
    )(ht, d)

    # Pure metadata reshape — the kernel output is already in the final order.
    return out2d.reshape(npts, npts, nin_total, R * nout)


# ------------------------------------------------------- numpy reference ----

def rotate_hermite_reference(coeffs, H, Rs, num_rotations, first_layer):
    num_coeffs, nin_total, nout = coeffs.shape
    num_inputs = nin_total // num_rotations
    ws = []
    for i in range(num_rotations):
        cr = np.tensordot(Rs[i], coeffs, axes=([1], [0]))
        w = np.tensordot(H, cr, axes=([0], [0]))
        if i and (not first_layer):
            shift = nin_total - i * num_inputs
            w = np.concatenate([w[:, :, shift:, :], w[:, :, :shift, :]], axis=2)
        ws.append(w)
    return np.concatenate(ws, axis=3)


# -------------------------------------------------------------------- main --

if __name__ == "__main__":
    # Small but representative configuration.
    filter_size = 4      # -> nbases = 4*5/2 = 10
    upsampling = 2       # -> npts = 8
    num_rotations = 4
    first_layer = False
    num_inputs_total = 8
    num_outputs = 4

    # Deterministic parameter construction (same as module __init__).
    H_np, desc, mu = hermite_2d(
        filter_size, filter_size * upsampling, 2 * np.sqrt(filter_size)
    )
    angles = [i * 2 * pi / num_rotations for i in range(num_rotations)]
    Rs_np = np.stack(
        [rotation_matrix(desc, mu, a) for a in angles], axis=0
    ).astype(np.float32)
    H_np = H_np.astype(np.float32)

    nbases = H_np.shape[0]
    key = jax.random.PRNGKey(0)
    coeffs = jax.random.normal(
        key, (nbases, num_inputs_total, num_outputs), dtype=jnp.float32
    )

    out = rotate_hermite_forward(
        coeffs, jnp.asarray(H_np), jnp.asarray(Rs_np), num_rotations, first_layer
    )
    out = jax.block_until_ready(out)

    ref = rotate_hermite_reference(
        np.asarray(coeffs, dtype=np.float64),
        H_np.astype(np.float64),
        Rs_np.astype(np.float64),
        num_rotations,
        first_layer,
    )

    assert out.shape == ref.shape, (out.shape, ref.shape)
    np.testing.assert_allclose(np.asarray(out), ref, rtol=1e-4, atol=1e-4)
    print("KERNEL_OK")
</pallas_src>

<mosaic_0001>
module attributes {stable_mosaic.version = 11 : i64} {
  func.func @_rotate_hermite_kernel(%arg0: i32, %arg1: memref<64x10xf32, #tpu.memory_space<vmem>>, %arg2: memref<10x128xf32, #tpu.memory_space<vmem>>, %arg3: memref<64x128xf32, #tpu.memory_space<vmem>>) attributes {dimension_semantics = [#tpu.dimension_semantics<parallel>], iteration_bounds = array<i64: 1>, scalar_prefetch = 0 : i64, scratch_operands = 0 : i64, tpu.core_type = #tpu.core_type<tc>, window_params = [{pipeline_mode = #tpu.pipeline_mode<synchronous>, transform_indices = @transform_0, window_bounds = array<i64: 64, 10>}, {transform_indices = @transform_1, window_bounds = array<i64: 10, 128>}, {transform_indices = @transform_2, window_bounds = array<i64: 64, 128>}]} {
    %c0 = arith.constant 0 : index
    %c0_0 = arith.constant 0 : index
    %0 = vector.load %arg1[%c0, %c0_0] : memref<64x10xf32, #tpu.memory_space<vmem>>, vector<64x10xf32>
    %c0_1 = arith.constant 0 : index
    %c0_2 = arith.constant 0 : index
    %1 = vector.load %arg2[%c0_1, %c0_2] : memref<10x128xf32, #tpu.memory_space<vmem>>, vector<10x128xf32>
    %cst = arith.constant dense<0.000000e+00> : vector<64x128xf32>
    %2 = tpu.matmul %0, %1, %cst {dimension_numbers = #tpu.dot_dimension_numbers<[1], [0], [0], [1], [0, 0, 1, 1], [], []>} : vector<64x10xf32>, vector<10x128xf32>, vector<64x128xf32> -> vector<64x128xf32>
    %c0_3 = arith.constant 0 : index
    %c0_4 = arith.constant 0 : index
    %3 = vector.load %arg3[%c0_3, %c0_4] : memref<64x128xf32, #tpu.memory_space<vmem>>, vector<64x128xf32>
    tpu.vector_store %arg3[%c0_3, %c0_4], %2 {strides = array<i32>} : memref<64x128xf32, #tpu.memory_space<vmem>>, vector<64x128xf32>,
    return
  }
  func.func @transform_0(%arg0: i32) -> (i32, i32) {
    %c0_i32 = arith.constant 0 : i32
    %c0_i32_0 = arith.constant 0 : i32
    %c0_i32_1 = arith.constant 0 : i32
    return %c0_i32, %c0_i32_0 : i32, i32
  }
  func.func @transform_1(%arg0: i32) -> (i32, i32) {
    %c0_i32 = arith.constant 0 : i32
    %c0_i32_0 = arith.constant 0 : i32
    return %c0_i32, %arg0 : i32, i32
  }
  func.func @transform_2(%arg0: i32) -> (i32, i32) {
    %c0_i32 = arith.constant 0 : i32
    %c0_i32_0 = arith.constant 0 : i32
    return %c0_i32, %arg0 : i32, i32
  }
}

</mosaic_0001>

<llo_original>
// kernel: tpu_custom_call.1
$region0: #{tpu_custom_call.1}
  #allocation0 [shape = 'u32[]', space=smem, size = 0x4, offset = 0x4, fixed_abs, tag = 'smem constant byte address 0x4 - core index']
  #allocation1 [shape = 'u32[144,128]{1,0:T(1,128)}', space=vmem, size = 0x12000, scoped, tag = 'internal scratch']
  %s0 = inlined_call_operand.vmem [shape: f32[64,10], index: 0, kind: input, shape index: {}]
  %s1 = inlined_call_operand.vmem [shape: f32[10,128], index: 1, kind: input, shape index: {}]
  %s2 = inlined_call_operand.hbm [shape: f32[64,128], index: 2, kind: output, shape index: {}]
  %s3 = sld [smem:[#allocation0]]
  $region18: #{tpu_custom_call.1} parent=0
    _
  %s5 = ssub.s32 1, %s3
  %s6 = scalar_select 0, %s5, %s3
  $region1: #{tpu_custom_call.1} parent=0
    #allocation2 [shape = 'u8[32768]{0}', space=vmem, size = 0x8000, scoped, tag = 'output window, operand 0, single buffered']
    #allocation3 [shape = 's32[1]{0}', space=sflag, size = 0x4, scoped, tag = 'scoped memory for tpu_custom_call.1']
    %7 = vsyncpa [#allocation3], 0
    // Predicated region
    $region2: #{tpu_custom_call.1} parent=1 // pred_check
      _
    $region3: #{tpu_custom_call.1} parent=1 // pred_check_branch
      %9 = sbr.rel (0) target = $region5
    $region4: #{tpu_custom_call.1} parent=1 // pred_region
      _
    $region5: #{tpu_custom_call.1} parent=1 // pred_fallthru
      _
    // Predicated region
    $region6: #{tpu_custom_call.1} parent=1 // pred_check
      _
    $region7: #{tpu_custom_call.1} parent=1 // pred_check_branch
      %11 = sbr.rel (0) target = $region9
    $region8: #{tpu_custom_call.1} parent=1 // pred_region
      _
    $region9: #{tpu_custom_call.1} parent=1 // pred_fallthru
      _
    %v12 = vld [vmem:[%s0] sm:$0xff]
    %v13 = vld [vmem:[%s0 + $0x8] sm:$0xff]
    %v14 = vld [vmem:[%s0 + $0x10] sm:$0xff]
    %v15 = vld [vmem:[%s0 + $0x18] sm:$0xff]
    %v16 = vld [vmem:[%s0 + $0x20] sm:$0xff]
    %v17 = vld [vmem:[%s0 + $0x28] sm:$0xff]
    %v18 = vld [vmem:[%s0 + $0x30] sm:$0xff]
    %v19 = vld [vmem:[%s0 + $0x38] sm:$0xff]
    %v20 = vld [vmem:[%s1] sm:$0xff]
    %v21 = vld [vmem:[%s1 + $0x8] sm:$0x3]
    %vm22 = vcmask 80896
    %v24 = vsel %vm22, %v12, 0
    %v27 = vsel %vm22, %v13, 0
    %v30 = vsel %vm22, %v14, 0
    %v33 = vsel %vm22, %v15, 0
    %v36 = vsel %vm22, %v16, 0
    %v39 = vsel %vm22, %v17, 0
    %v42 = vsel %vm22, %v18, 0
    %v45 = vsel %vm22, %v19, 0
    %vm47 = vcmask 1041408
    %v49 = vsel %vm47, %v21, 0
    %51 = vmatprep.subr.mxu0 0.0
    %52 = vmatpush1.msra.mxu0 0.0
    %53 = vmatprep.subr.mxu0 0.0
    %54 = vmatpush1.msra.mxu0 0.0
    %55 = vmatprep.subr.mxu0 0.0
    %56 = vmatpush1.msra.mxu0 0.0
    %57 = vmatprep.subr.mxu0 0.0
    %58 = vmatpush1.msra.mxu0 0.0
    %59 = vmatprep.subr.mxu0 0.0
    %60 = vmatpush1.msra.mxu0 0.0
    %61 = vmatprep.subr.mxu0 0.0
    %62 = vmatpush1.msra.mxu0 0.0
    %63 = vmatprep.subr.mxu0 0.0
    %64 = vmatpush1.msra.mxu0 0.0
    %65 = vmatprep.subr.mxu0 0.0
    %66 = vmatpush1.msra.mxu0 0.0
    %67 = vmatprep.subr.mxu0 0.0
    %68 = vmatpush1.msra.mxu0 0.0
    %69 = vmatprep.subr.mxu0 0.0
    %70 = vmatpush1.msra.mxu0 0.0
    %71 = vmatprep.subr.mxu0 0.0
    %72 = vmatpush1.msra.mxu0 0.0
    %73 = vmatprep.subr.mxu0 0.0
    %74 = vmatpush1.msra.mxu0 0.0
    %75 = vmatprep.subr.mxu0 0.0
    %76 = vmatpush1.msra.mxu0 0.0
    %77 = vmatprep.subr.mxu0 0.0
    %78 = vmatpush1.msra.mxu0 0.0
    %79 = vmatprep.subr.mxu0 0.0
    %80 = vmatpush1.msra.mxu0 %v49
    %81 = vmatprep.subr.mxu0 0.0
    %82 = vmatpush1.msra.mxu0 %v20
    %83 = vmatprep.subr.mxu0 0.0
    %84 = vmatpush2.msra.mxu0 0.0
    %85 = vmatprep.subr.mxu0 0.0
    %86 = vmatpush2.msra.mxu0 0.0
    %87 = vmatprep.subr.mxu0 0.0
    %88 = vmatpush2.msra.mxu0 0.0
    %89 = vmatprep.subr.mxu0 0.0
    %90 = vmatpush2.msra.mxu0 0.0
    %91 = vmatprep.subr.mxu0 0.0
    %92 = vmatpush2.msra.mxu0 0.0
    %93 = vmatprep.subr.mxu0 0.0
    %94 = vmatpush2.msra.mxu0 0.0
    %95 = vmatprep.subr.mxu0 0.0
    %96 = vmatpush2.msra.mxu0 0.0
    %97 = vmatprep.subr.mxu0 0.0
    %98 = vmatpush2.msra.mxu0 0.0
    %99 = vmatprep.subr.mxu0 0.0
    %100 = vmatpush2.msra.mxu0 0.0
    %101 = vmatprep.subr.mxu0 0.0
    %102 = vmatpush2.msra.mxu0 0.0
    %103 = vmatprep.subr.mxu0 0.0
    %104 = vmatpush2.msra.mxu0 0.0
    %105 = vmatprep.subr.mxu0 0.0
    %106 = vmatpush2.msra.mxu0 0.0
    %107 = vmatprep.subr.mxu0 0.0
    %108 = vmatpush2.msra.mxu0 0.0
    %109 = vmatprep.subr.mxu0 0.0
    %110 = vmatpush2.msra.mxu0 0.0
    %111 = vmatprep.subr.mxu0 0.0
    %112 = vmatpush2.msra.mxu0 0.0
    %113 = vmatprep.subr.mxu0 0.0
    %114 = vmatpush2.msra.mxu0 0.0
    %115 = vmatprep.mubr.f32.mxu0 0.0
    %116 = vmatmul.mubr.f32.gmra.mxu0 %v24
    %v117 = vpop.f32.mrf.mxu0
    %v118 = vadd.f32 0.0, %v117
    %v119 = vpop.f32.mrf.mxu0
    %120 = vmatprep.mubr.f32.mxu0 0.0
    %121 = vmatmul.mubr.f32.gmra.mxu0 %v27
    %v122 = vpop.f32.mrf.mxu0
    %v123 = vadd.f32 0.0, %v122
    %v124 = vpop.f32.mrf.mxu0
    %125 = vmatprep.mubr.f32.mxu0 0.0
    %126 = vmatmul.mubr.f32.gmra.mxu0 %v30
    %v127 = vpop.f32.mrf.mxu0
    %v128 = vadd.f32 0.0, %v127
    %v129 = vpop.f32.mrf.mxu0
    %130 = vmatprep.mubr.f32.mxu0 0.0
    %131 = vmatmul.mubr.f32.gmra.mxu0 %v33
    %v132 = vpop.f32.mrf.mxu0
    %v133 = vadd.f32 0.0, %v132
    %v134 = vpop.f32.mrf.mxu0
    %135 = vmatprep.mubr.f32.mxu0 0.0
    %136 = vmatmul.mubr.f32.gmra.mxu0 %v36
    %v137 = vpop.f32.mrf.mxu0
    %v138 = vadd.f32 0.0, %v137
    %v139 = vpop.f32.mrf.mxu0
    %140 = vmatprep.mubr.f32.mxu0 0.0
    %141 = vmatmul.mubr.f32.gmra.mxu0 %v39
    %v142 = vpop.f32.mrf.mxu0
    %v143 = vadd.f32 0.0, %v142
    %v144 = vpop.f32.mrf.mxu0
    %145 = vmatprep.mubr.f32.mxu0 0.0
    %146 = vmatmul.mubr.f32.gmra.mxu0 %v42
    %v147 = vpop.f32.mrf.mxu0
    %v148 = vadd.f32 0.0, %v147
    %v149 = vpop.f32.mrf.mxu0
    %150 = vmatprep.mubr.f32.mxu0 0.0
    %151 = vmatmul.mubr.f32.gmra.mxu0 %v45
    %v152 = vpop.f32.mrf.mxu0
    %v153 = vadd.f32 0.0, %v152
    %v154 = vpop.f32.mrf.mxu0
    %155 = vdwg.mxu0
    %156 = vst [vmem:[#allocation2] sm:$0xff] %v118
    %157 = vst [vmem:[#allocation2 + $0x8] sm:$0xff] %v123
    %158 = vst [vmem:[#allocation2 + $0x10] sm:$0xff] %v128
    %159 = vst [vmem:[#allocation2 + $0x18] sm:$0xff] %v133
    %160 = vst [vmem:[#allocation2 + $0x20] sm:$0xff] %v138
    %161 = vst [vmem:[#allocation2 + $0x28] sm:$0xff] %v143
    %162 = vst [vmem:[#allocation2 + $0x30] sm:$0xff] %v148
    %163 = vst [vmem:[#allocation2 + $0x38] sm:$0xff] %v153
    // Predicated region
    $region10: #{tpu_custom_call.1} parent=1 // pred_check
      _
    $region11: #{tpu_custom_call.1} parent=1 // pred_check_branch
      %165 = sbr.rel (0) target = $region13
    $region12: #{tpu_custom_call.1} parent=1 // pred_region
      %s167 = ssub.s32 1024, 1024
      %168 = vsyncadd [#allocation3], %s167
      %s169 = sshll.u32 [#allocation2], 4
      %s170 = int_to_ptr.vmem [resolvable:$true] %s169
      %175 = dma.vmem_to_hbm [thread:$0]  %s170, 1024, %s2, [#allocation3], 128, 128, 8
    $region13: #{tpu_custom_call.1} parent=1 // pred_fallthru
      _
    // Predicated region
    $region14: #{tpu_custom_call.1} parent=1 // pred_check
      _
    $region15: #{tpu_custom_call.1} parent=1 // pred_check_branch
      %177 = sbr.rel (0) target = $region17
    $region16: #{tpu_custom_call.1} parent=1 // pred_region
      %178 = dma.done [#allocation3], 1024
    $region17: #{tpu_custom_call.1} parent=1 // pred_fallthru
      _
    %179 = vsyncpa [#allocation3], 1

</llo_original>
